<compile_context>
chip_gen: v5e
topology: v5e:2x2
jax: 0.10.0
libtpu: 0.0.40
codegen_flags: <defaults>
</compile_context>

<pallas_src>
import math
import functools

import jax
import jax.numpy as jnp
from jax import lax
from jax.experimental import pallas as pl
from jax.experimental.pallas import tpu as pltpu


def _mha_kernel(q_ref, k_ref, v_ref,
                wq_ref, wk_ref, wv_ref, wo_ref,
                bq_ref, bk_ref, bv_ref, bo_ref,
                o_ref, *, heads, scale):
    """Single invocation; everything resident in VMEM.

    q_ref/k_ref/v_ref : (B, S, D)
    w*_ref            : (D, D)   math orientation (in, out)
    b*_ref            : (1, D)
    o_ref             : (B, S, D)
    """
    f32 = jnp.float32
    B, S, D = q_ref.shape
    d_k = D // heads

    wq = wq_ref[...].astype(f32)
    wk = wk_ref[...].astype(f32)
    wv = wv_ref[...].astype(f32)
    wo = wo_ref[...].astype(f32)
    bq = bq_ref[...].astype(f32)
    bk = bk_ref[...].astype(f32)
    bv = bv_ref[...].astype(f32)
    bo = bo_ref[...].astype(f32)

    for b in range(B):  # static unroll; B is tiny
        x_q = q_ref[b].astype(f32)   # (S, D)
        x_k = k_ref[b].astype(f32)
        x_v = v_ref[b].astype(f32)

        # Full-width projections: 3 MXU pushes instead of 3*heads tiny ones.
        Q = jnp.dot(x_q, wq, preferred_element_type=f32) + bq   # (S, D)
        K = jnp.dot(x_k, wk, preferred_element_type=f32) + bk
        V = jnp.dot(x_v, wv, preferred_element_type=f32) + bv

        ctx_heads = []
        for h in range(heads):  # static unroll; per-head slices are static lane selects
            lo, hi = h * d_k, (h + 1) * d_k
            qh = Q[:, lo:hi]          # (S, d_k)
            kh = K[:, lo:hi]
            vh = V[:, lo:hi]

            # scores = qh @ kh^T / sqrt(d_k)  (contract d_k of both operands)
            s = lax.dot_general(qh, kh, (((1,), (1,)), ((), ())),
                                preferred_element_type=f32) * scale        # (S, S)
            s = s - jnp.max(s, axis=-1, keepdims=True)
            e = jnp.exp(s)
            # EUP reciprocal instead of a VALU divide.
            p = e * pl.reciprocal(jnp.sum(e, axis=-1, keepdims=True), approx=True)

            ctx_heads.append(jnp.dot(p, vh, preferred_element_type=f32))   # (S, d_k)

        # Lane-concatenate heads and do ONE full-width output projection.
        concat = jnp.concatenate(ctx_heads, axis=-1)                       # (S, D)
        out = jnp.dot(concat, wo, preferred_element_type=f32) + bo         # (S, D)
        o_ref[b] = out.astype(o_ref.dtype)


def multi_head_attention(q, k, v, params, heads):
    """q, k, v: (B, S, D) float32.  params = (Wq, bq, Wk, bk, Wv, bv, Wo, bo) with
    W in math orientation (D_in, D_out) and b of shape (D,)."""
    B, S, D = q.shape
    assert D % heads == 0
    d_k = D // heads
    Wq, bq, Wk, bk, Wv, bv, Wo, bo = params

    # Biases as (1, D) rows so the in-kernel add is a plain broadcast over sublanes.
    bq2 = bq.reshape(1, D)
    bk2 = bk.reshape(1, D)
    bv2 = bv.reshape(1, D)
    bo2 = bo.reshape(1, D)

    kernel = functools.partial(_mha_kernel, heads=heads, scale=1.0 / math.sqrt(d_k))

    # Rough cost hint for the XLA scheduler.
    flops = 2 * B * S * D * (4 * D + 2 * S)                 # 4 DxD projections + 2 SxS per-head matmuls
    transcendentals = B * heads * S * S + B * heads * S     # exp + reciprocal
    bytes_accessed = 4 * (4 * B * S * D + 4 * D * D + 4 * D)
    cost = pl.CostEstimate(flops=flops, transcendentals=transcendentals,
                           bytes_accessed=bytes_accessed)

    vmem = pltpu.MemorySpace.VMEM
    n_inputs = 11
    return pl.pallas_call(
        kernel,
        out_shape=jax.ShapeDtypeStruct((B, S, D), q.dtype),
        in_specs=[pl.BlockSpec(memory_space=vmem)] * n_inputs,
        out_specs=pl.BlockSpec(memory_space=vmem),
        cost_estimate=cost,
    )(q, k, v, Wq, Wk, Wv, Wo, bq2, bk2, bv2, bo2)


if __name__ == "__main__":
    # Small shapes consistent with the module: batch=2, seq=8, d_model=32, heads=4.
    B, S, D, H = 2, 8, 32, 4
    d_k = D // H

    key = jax.random.PRNGKey(0)
    keys = jax.random.split(key, 11)
    bound = 1.0 / math.sqrt(D)   # PyTorch Linear default init scale

    q = jax.random.normal(keys[0], (B, S, D), jnp.float32)
    k = jax.random.normal(keys[1], (B, S, D), jnp.float32)
    v = jax.random.normal(keys[2], (B, S, D), jnp.float32)

    def mk_w(kk):
        return jax.random.uniform(kk, (D, D), jnp.float32, -bound, bound)

    def mk_b(kk):
        return jax.random.uniform(kk, (D,), jnp.float32, -bound, bound)

    Wq, bq = mk_w(keys[3]), mk_b(keys[4])
    Wk, bk = mk_w(keys[5]), mk_b(keys[6])
    Wv, bv = mk_w(keys[7]), mk_b(keys[8])
    Wo, bo = mk_w(keys[9]), mk_b(keys[10])
    params = (Wq, bq, Wk, bk, Wv, bv, Wo, bo)

    out = multi_head_attention(q, k, v, params, H)
    out = jax.block_until_ready(out)

    # Pure-JAX reference (PyTorch module semantics: eval mode, mask=None).
    def ref_mha(q, k, v):
        Q = (q @ Wq + bq).reshape(B, S, H, d_k).transpose(0, 2, 1, 3)
        K = (k @ Wk + bk).reshape(B, S, H, d_k).transpose(0, 2, 1, 3)
        V = (v @ Wv + bv).reshape(B, S, H, d_k).transpose(0, 2, 1, 3)
        s = jnp.einsum('bhqd,bhkd->bhqk', Q, K) / math.sqrt(d_k)
        p = jax.nn.softmax(s, axis=-1)
        ctx = jnp.einsum('bhqk,bhkd->bhqd', p, V)
        concat = ctx.transpose(0, 2, 1, 3).reshape(B, S, D)
        return concat @ Wo + bo

    ref = ref_mha(q, k, v)
    assert out.shape == (B, S, D)
    err = float(jnp.max(jnp.abs(out - ref)))
    assert jnp.allclose(out, ref, atol=2e-2, rtol=2e-2), err

    print("KERNEL_OK")
</pallas_src>

<mosaic_0001>
module attributes {stable_mosaic.version = 11 : i64} {
  func.func @_mha_kernel(%arg0: memref<2x8x32xf32, #tpu.memory_space<vmem>>, %arg1: memref<2x8x32xf32, #tpu.memory_space<vmem>>, %arg2: memref<2x8x32xf32, #tpu.memory_space<vmem>>, %arg3: memref<32x32xf32, #tpu.memory_space<vmem>>, %arg4: memref<32x32xf32, #tpu.memory_space<vmem>>, %arg5: memref<32x32xf32, #tpu.memory_space<vmem>>, %arg6: memref<32x32xf32, #tpu.memory_space<vmem>>, %arg7: memref<1x32xf32, #tpu.memory_space<vmem>>, %arg8: memref<1x32xf32, #tpu.memory_space<vmem>>, %arg9: memref<1x32xf32, #tpu.memory_space<vmem>>, %arg10: memref<1x32xf32, #tpu.memory_space<vmem>>, %arg11: memref<2x8x32xf32, #tpu.memory_space<vmem>>) attributes {dimension_semantics = [], scalar_prefetch = 0 : i64, scratch_operands = 0 : i64, tpu.core_type = #tpu.core_type<tc>} {
    %c0 = arith.constant 0 : index
    %c0_0 = arith.constant 0 : index
    %0 = vector.load %arg3[%c0, %c0_0] : memref<32x32xf32, #tpu.memory_space<vmem>>, vector<32x32xf32>
    %c0_1 = arith.constant 0 : index
    %c0_2 = arith.constant 0 : index
    %1 = vector.load %arg4[%c0_1, %c0_2] : memref<32x32xf32, #tpu.memory_space<vmem>>, vector<32x32xf32>
    %c0_3 = arith.constant 0 : index
    %c0_4 = arith.constant 0 : index
    %2 = vector.load %arg5[%c0_3, %c0_4] : memref<32x32xf32, #tpu.memory_space<vmem>>, vector<32x32xf32>
    %c0_5 = arith.constant 0 : index
    %c0_6 = arith.constant 0 : index
    %3 = vector.load %arg6[%c0_5, %c0_6] : memref<32x32xf32, #tpu.memory_space<vmem>>, vector<32x32xf32>
    %c0_7 = arith.constant 0 : index
    %c0_8 = arith.constant 0 : index
    %4 = vector.load %arg7[%c0_7, %c0_8] : memref<1x32xf32, #tpu.memory_space<vmem>>, vector<1x32xf32>
    %c0_9 = arith.constant 0 : index
    %c0_10 = arith.constant 0 : index
    %5 = vector.load %arg8[%c0_9, %c0_10] : memref<1x32xf32, #tpu.memory_space<vmem>>, vector<1x32xf32>
    %c0_11 = arith.constant 0 : index
    %c0_12 = arith.constant 0 : index
    %6 = vector.load %arg9[%c0_11, %c0_12] : memref<1x32xf32, #tpu.memory_space<vmem>>, vector<1x32xf32>
    %c0_13 = arith.constant 0 : index
    %c0_14 = arith.constant 0 : index
    %7 = vector.load %arg10[%c0_13, %c0_14] : memref<1x32xf32, #tpu.memory_space<vmem>>, vector<1x32xf32>
    %c0_15 = arith.constant 0 : index
    %c0_16 = arith.constant 0 : index
    %c0_17 = arith.constant 0 : index
    %8 = vector.load %arg0[%c0_15, %c0_16, %c0_17] : memref<2x8x32xf32, #tpu.memory_space<vmem>>, vector<1x8x32xf32>
    %9 = vector.shape_cast %8 : vector<1x8x32xf32> to vector<8x32xf32>
    %c0_18 = arith.constant 0 : index
    %c0_19 = arith.constant 0 : index
    %c0_20 = arith.constant 0 : index
    %10 = vector.load %arg1[%c0_18, %c0_19, %c0_20] : memref<2x8x32xf32, #tpu.memory_space<vmem>>, vector<1x8x32xf32>
    %11 = vector.shape_cast %10 : vector<1x8x32xf32> to vector<8x32xf32>
    %c0_21 = arith.constant 0 : index
    %c0_22 = arith.constant 0 : index
    %c0_23 = arith.constant 0 : index
    %12 = vector.load %arg2[%c0_21, %c0_22, %c0_23] : memref<2x8x32xf32, #tpu.memory_space<vmem>>, vector<1x8x32xf32>
    %13 = vector.shape_cast %12 : vector<1x8x32xf32> to vector<8x32xf32>
    %cst = arith.constant dense<0.000000e+00> : vector<8x32xf32>
    %14 = tpu.matmul %9, %0, %cst {dimension_numbers = #tpu.dot_dimension_numbers<[1], [0], [0], [1], [0, 0, 1, 1], [], []>} : vector<8x32xf32>, vector<32x32xf32>, vector<8x32xf32> -> vector<8x32xf32>
    %15 = vector.broadcast %4 : vector<1x32xf32> to vector<8x32xf32>
    %16 = arith.addf %14, %15 : vector<8x32xf32>
    %cst_24 = arith.constant dense<0.000000e+00> : vector<8x32xf32>
    %17 = tpu.matmul %11, %1, %cst_24 {dimension_numbers = #tpu.dot_dimension_numbers<[1], [0], [0], [1], [0, 0, 1, 1], [], []>} : vector<8x32xf32>, vector<32x32xf32>, vector<8x32xf32> -> vector<8x32xf32>
    %18 = vector.broadcast %5 : vector<1x32xf32> to vector<8x32xf32>
    %19 = arith.addf %17, %18 : vector<8x32xf32>
    %cst_25 = arith.constant dense<0.000000e+00> : vector<8x32xf32>
    %20 = tpu.matmul %13, %2, %cst_25 {dimension_numbers = #tpu.dot_dimension_numbers<[1], [0], [0], [1], [0, 0, 1, 1], [], []>} : vector<8x32xf32>, vector<32x32xf32>, vector<8x32xf32> -> vector<8x32xf32>
    %21 = vector.broadcast %6 : vector<1x32xf32> to vector<8x32xf32>
    %22 = arith.addf %20, %21 : vector<8x32xf32>
    %23 = vector.extract_strided_slice %16 {offsets = [0, 0], sizes = [8, 8], strides = [1, 1]} : vector<8x32xf32> to vector<8x8xf32>
    %24 = vector.extract_strided_slice %19 {offsets = [0, 0], sizes = [8, 8], strides = [1, 1]} : vector<8x32xf32> to vector<8x8xf32>
    %25 = vector.extract_strided_slice %22 {offsets = [0, 0], sizes = [8, 8], strides = [1, 1]} : vector<8x32xf32> to vector<8x8xf32>
    %cst_26 = arith.constant dense<0.000000e+00> : vector<8x8xf32>
    %26 = tpu.matmul %23, %24, %cst_26 {dimension_numbers = #tpu.dot_dimension_numbers<[1], [1], [0], [0], [0, 0, 1, 0], [], []>} : vector<8x8xf32>, vector<8x8xf32>, vector<8x8xf32> -> vector<8x8xf32>
    %cst_27 = arith.constant 0.353553385 : f32
    %27 = vector.broadcast %cst_27 : f32 to vector<8x8xf32>
    %28 = arith.mulf %26, %27 : vector<8x8xf32>
    %cst_28 = arith.constant dense<0xFF800000> : vector<8xf32>
    %29 = vector.multi_reduction <maximumf>, %28, %cst_28 [1] : vector<8x8xf32> to vector<8xf32>
    %30 = vector.shape_cast %29 : vector<8xf32> to vector<8x1xf32>
    %31 = vector.broadcast %30 : vector<8x1xf32> to vector<8x8xf32>
    %32 = arith.subf %28, %31 : vector<8x8xf32>
    %33 = math.exp %32 : vector<8x8xf32>
    %cst_29 = arith.constant dense<0.000000e+00> : vector<8xf32>
    %34 = vector.multi_reduction <add>, %33, %cst_29 [1] : vector<8x8xf32> to vector<8xf32>
    %35 = vector.shape_cast %34 : vector<8xf32> to vector<8x1xf32>
    %36 = tpu.reciprocal %35 {approx = true} : vector<8x1xf32> -> vector<8x1xf32>
    %37 = vector.broadcast %36 : vector<8x1xf32> to vector<8x8xf32>
    %38 = arith.mulf %33, %37 : vector<8x8xf32>
    %cst_30 = arith.constant dense<0.000000e+00> : vector<8x8xf32>
    %39 = tpu.matmul %38, %25, %cst_30 {dimension_numbers = #tpu.dot_dimension_numbers<[1], [0], [0], [1], [0, 0, 1, 1], [], []>} : vector<8x8xf32>, vector<8x8xf32>, vector<8x8xf32> -> vector<8x8xf32>
    %40 = vector.extract_strided_slice %16 {offsets = [0, 8], sizes = [8, 8], strides = [1, 1]} : vector<8x32xf32> to vector<8x8xf32>
    %41 = vector.extract_strided_slice %19 {offsets = [0, 8], sizes = [8, 8], strides = [1, 1]} : vector<8x32xf32> to vector<8x8xf32>
    %42 = vector.extract_strided_slice %22 {offsets = [0, 8], sizes = [8, 8], strides = [1, 1]} : vector<8x32xf32> to vector<8x8xf32>
    %cst_31 = arith.constant dense<0.000000e+00> : vector<8x8xf32>
    %43 = tpu.matmul %40, %41, %cst_31 {dimension_numbers = #tpu.dot_dimension_numbers<[1], [1], [0], [0], [0, 0, 1, 0], [], []>} : vector<8x8xf32>, vector<8x8xf32>, vector<8x8xf32> -> vector<8x8xf32>
    %cst_32 = arith.constant 0.353553385 : f32
    %44 = vector.broadcast %cst_32 : f32 to vector<8x8xf32>
    %45 = arith.mulf %43, %44 : vector<8x8xf32>
    %cst_33 = arith.constant dense<0xFF800000> : vector<8xf32>
    %46 = vector.multi_reduction <maximumf>, %45, %cst_33 [1] : vector<8x8xf32> to vector<8xf32>
    %47 = vector.shape_cast %46 : vector<8xf32> to vector<8x1xf32>
    %48 = vector.broadcast %47 : vector<8x1xf32> to vector<8x8xf32>
    %49 = arith.subf %45, %48 : vector<8x8xf32>
    %50 = math.exp %49 : vector<8x8xf32>
    %cst_34 = arith.constant dense<0.000000e+00> : vector<8xf32>
    %51 = vector.multi_reduction <add>, %50, %cst_34 [1] : vector<8x8xf32> to vector<8xf32>
    %52 = vector.shape_cast %51 : vector<8xf32> to vector<8x1xf32>
    %53 = tpu.reciprocal %52 {approx = true} : vector<8x1xf32> -> vector<8x1xf32>
    %54 = vector.broadcast %53 : vector<8x1xf32> to vector<8x8xf32>
    %55 = arith.mulf %50, %54 : vector<8x8xf32>
    %cst_35 = arith.constant dense<0.000000e+00> : vector<8x8xf32>
    %56 = tpu.matmul %55, %42, %cst_35 {dimension_numbers = #tpu.dot_dimension_numbers<[1], [0], [0], [1], [0, 0, 1, 1], [], []>} : vector<8x8xf32>, vector<8x8xf32>, vector<8x8xf32> -> vector<8x8xf32>
    %57 = vector.extract_strided_slice %16 {offsets = [0, 16], sizes = [8, 8], strides = [1, 1]} : vector<8x32xf32> to vector<8x8xf32>
    %58 = vector.extract_strided_slice %19 {offsets = [0, 16], sizes = [8, 8], strides = [1, 1]} : vector<8x32xf32> to vector<8x8xf32>
    %59 = vector.extract_strided_slice %22 {offsets = [0, 16], sizes = [8, 8], strides = [1, 1]} : vector<8x32xf32> to vector<8x8xf32>
    %cst_36 = arith.constant dense<0.000000e+00> : vector<8x8xf32>
    %60 = tpu.matmul %57, %58, %cst_36 {dimension_numbers = #tpu.dot_dimension_numbers<[1], [1], [0], [0], [0, 0, 1, 0], [], []>} : vector<8x8xf32>, vector<8x8xf32>, vector<8x8xf32> -> vector<8x8xf32>
    %cst_37 = arith.constant 0.353553385 : f32
    %61 = vector.broadcast %cst_37 : f32 to vector<8x8xf32>
    %62 = arith.mulf %60, %61 : vector<8x8xf32>
    %cst_38 = arith.constant dense<0xFF800000> : vector<8xf32>
    %63 = vector.multi_reduction <maximumf>, %62, %cst_38 [1] : vector<8x8xf32> to vector<8xf32>
    %64 = vector.shape_cast %63 : vector<8xf32> to vector<8x1xf32>
    %65 = vector.broadcast %64 : vector<8x1xf32> to vector<8x8xf32>
    %66 = arith.subf %62, %65 : vector<8x8xf32>
    %67 = math.exp %66 : vector<8x8xf32>
    %cst_39 = arith.constant dense<0.000000e+00> : vector<8xf32>
    %68 = vector.multi_reduction <add>, %67, %cst_39 [1] : vector<8x8xf32> to vector<8xf32>
    %69 = vector.shape_cast %68 : vector<8xf32> to vector<8x1xf32>
    %70 = tpu.reciprocal %69 {approx = true} : vector<8x1xf32> -> vector<8x1xf32>
    %71 = vector.broadcast %70 : vector<8x1xf32> to vector<8x8xf32>
    %72 = arith.mulf %67, %71 : vector<8x8xf32>
    %cst_40 = arith.constant dense<0.000000e+00> : vector<8x8xf32>
    %73 = tpu.matmul %72, %59, %cst_40 {dimension_numbers = #tpu.dot_dimension_numbers<[1], [0], [0], [1], [0, 0, 1, 1], [], []>} : vector<8x8xf32>, vector<8x8xf32>, vector<8x8xf32> -> vector<8x8xf32>
    %74 = vector.extract_strided_slice %16 {offsets = [0, 24], sizes = [8, 8], strides = [1, 1]} : vector<8x32xf32> to vector<8x8xf32>
    %75 = vector.extract_strided_slice %19 {offsets = [0, 24], sizes = [8, 8], strides = [1, 1]} : vector<8x32xf32> to vector<8x8xf32>
    %76 = vector.extract_strided_slice %22 {offsets = [0, 24], sizes = [8, 8], strides = [1, 1]} : vector<8x32xf32> to vector<8x8xf32>
    %cst_41 = arith.constant dense<0.000000e+00> : vector<8x8xf32>
    %77 = tpu.matmul %74, %75, %cst_41 {dimension_numbers = #tpu.dot_dimension_numbers<[1], [1], [0], [0], [0, 0, 1, 0], [], []>} : vector<8x8xf32>, vector<8x8xf32>, vector<8x8xf32> -> vector<8x8xf32>
    %cst_42 = arith.constant 0.353553385 : f32
    %78 = vector.broadcast %cst_42 : f32 to vector<8x8xf32>
    %79 = arith.mulf %77, %78 : vector<8x8xf32>
    %cst_43 = arith.constant dense<0xFF800000> : vector<8xf32>
    %80 = vector.multi_reduction <maximumf>, %79, %cst_43 [1] : vector<8x8xf32> to vector<8xf32>
    %81 = vector.shape_cast %80 : vector<8xf32> to vector<8x1xf32>
    %82 = vector.broadcast %81 : vector<8x1xf32> to vector<8x8xf32>
    %83 = arith.subf %79, %82 : vector<8x8xf32>
    %84 = math.exp %83 : vector<8x8xf32>
    %cst_44 = arith.constant dense<0.000000e+00> : vector<8xf32>
    %85 = vector.multi_reduction <add>, %84, %cst_44 [1] : vector<8x8xf32> to vector<8xf32>
    %86 = vector.shape_cast %85 : vector<8xf32> to vector<8x1xf32>
    %87 = tpu.reciprocal %86 {approx = true} : vector<8x1xf32> -> vector<8x1xf32>
    %88 = vector.broadcast %87 : vector<8x1xf32> to vector<8x8xf32>
    %89 = arith.mulf %84, %88 : vector<8x8xf32>
    %cst_45 = arith.constant dense<0.000000e+00> : vector<8x8xf32>
    %90 = tpu.matmul %89, %76, %cst_45 {dimension_numbers = #tpu.dot_dimension_numbers<[1], [0], [0], [1], [0, 0, 1, 1], [], []>} : vector<8x8xf32>, vector<8x8xf32>, vector<8x8xf32> -> vector<8x8xf32>
    %91 = tpu.concatenate %39, %56, %73, %90 in 1 : vector<8x8xf32>, vector<8x8xf32>, vector<8x8xf32>, vector<8x8xf32> -> vector<8x32xf32>
    %cst_46 = arith.constant dense<0.000000e+00> : vector<8x32xf32>
    %92 = tpu.matmul %91, %3, %cst_46 {dimension_numbers = #tpu.dot_dimension_numbers<[1], [0], [0], [1], [0, 0, 1, 1], [], []>} : vector<8x32xf32>, vector<32x32xf32>, vector<8x32xf32> -> vector<8x32xf32>
    %93 = vector.broadcast %7 : vector<1x32xf32> to vector<8x32xf32>
    %94 = arith.addf %92, %93 : vector<8x32xf32>
    %c0_47 = arith.constant 0 : index
    %c0_48 = arith.constant 0 : index
    %c0_49 = arith.constant 0 : index
    %95 = vector.load %arg11[%c0_47, %c0_48, %c0_49] : memref<2x8x32xf32, #tpu.memory_space<vmem>>, vector<1x8x32xf32>
    %96 = vector.shape_cast %95 : vector<1x8x32xf32> to vector<8x32xf32>
    %97 = vector.shape_cast %94 : vector<8x32xf32> to vector<1x8x32xf32>
    tpu.vector_store %arg11[%c0_47, %c0_48, %c0_49], %97 {strides = array<i32>} : memref<2x8x32xf32, #tpu.memory_space<vmem>>, vector<1x8x32xf32>,
    %c1 = arith.constant 1 : index
    %c0_50 = arith.constant 0 : index
    %c0_51 = arith.constant 0 : index
    %98 = vector.load %arg0[%c1, %c0_50, %c0_51] : memref<2x8x32xf32, #tpu.memory_space<vmem>>, vector<1x8x32xf32>
    %99 = vector.shape_cast %98 : vector<1x8x32xf32> to vector<8x32xf32>
    %c1_52 = arith.constant 1 : index
    %c0_53 = arith.constant 0 : index
    %c0_54 = arith.constant 0 : index
    %100 = vector.load %arg1[%c1_52, %c0_53, %c0_54] : memref<2x8x32xf32, #tpu.memory_space<vmem>>, vector<1x8x32xf32>
    %101 = vector.shape_cast %100 : vector<1x8x32xf32> to vector<8x32xf32>
    %c1_55 = arith.constant 1 : index
    %c0_56 = arith.constant 0 : index
    %c0_57 = arith.constant 0 : index
    %102 = vector.load %arg2[%c1_55, %c0_56, %c0_57] : memref<2x8x32xf32, #tpu.memory_space<vmem>>, vector<1x8x32xf32>
    %103 = vector.shape_cast %102 : vector<1x8x32xf32> to vector<8x32xf32>
    %cst_58 = arith.constant dense<0.000000e+00> : vector<8x32xf32>
    %104 = tpu.matmul %99, %0, %cst_58 {dimension_numbers = #tpu.dot_dimension_numbers<[1], [0], [0], [1], [0, 0, 1, 1], [], []>} : vector<8x32xf32>, vector<32x32xf32>, vector<8x32xf32> -> vector<8x32xf32>
    %105 = vector.broadcast %4 : vector<1x32xf32> to vector<8x32xf32>
    %106 = arith.addf %104, %105 : vector<8x32xf32>
    %cst_59 = arith.constant dense<0.000000e+00> : vector<8x32xf32>
    %107 = tpu.matmul %101, %1, %cst_59 {dimension_numbers = #tpu.dot_dimension_numbers<[1], [0], [0], [1], [0, 0, 1, 1], [], []>} : vector<8x32xf32>, vector<32x32xf32>, vector<8x32xf32> -> vector<8x32xf32>
    %108 = vector.broadcast %5 : vector<1x32xf32> to vector<8x32xf32>
    %109 = arith.addf %107, %108 : vector<8x32xf32>
    %cst_60 = arith.constant dense<0.000000e+00> : vector<8x32xf32>
    %110 = tpu.matmul %103, %2, %cst_60 {dimension_numbers = #tpu.dot_dimension_numbers<[1], [0], [0], [1], [0, 0, 1, 1], [], []>} : vector<8x32xf32>, vector<32x32xf32>, vector<8x32xf32> -> vector<8x32xf32>
    %111 = vector.broadcast %6 : vector<1x32xf32> to vector<8x32xf32>
    %112 = arith.addf %110, %111 : vector<8x32xf32>
    %113 = vector.extract_strided_slice %106 {offsets = [0, 0], sizes = [8, 8], strides = [1, 1]} : vector<8x32xf32> to vector<8x8xf32>
    %114 = vector.extract_strided_slice %109 {offsets = [0, 0], sizes = [8, 8], strides = [1, 1]} : vector<8x32xf32> to vector<8x8xf32>
    %115 = vector.extract_strided_slice %112 {offsets = [0, 0], sizes = [8, 8], strides = [1, 1]} : vector<8x32xf32> to vector<8x8xf32>
    %cst_61 = arith.constant dense<0.000000e+00> : vector<8x8xf32>
    %116 = tpu.matmul %113, %114, %cst_61 {dimension_numbers = #tpu.dot_dimension_numbers<[1], [1], [0], [0], [0, 0, 1, 0], [], []>} : vector<8x8xf32>, vector<8x8xf32>, vector<8x8xf32> -> vector<8x8xf32>
    %cst_62 = arith.constant 0.353553385 : f32
    %117 = vector.broadcast %cst_62 : f32 to vector<8x8xf32>
    %118 = arith.mulf %116, %117 : vector<8x8xf32>
    %cst_63 = arith.constant dense<0xFF800000> : vector<8xf32>
    %119 = vector.multi_reduction <maximumf>, %118, %cst_63 [1] : vector<8x8xf32> to vector<8xf32>
    %120 = vector.shape_cast %119 : vector<8xf32> to vector<8x1xf32>
    %121 = vector.broadcast %120 : vector<8x1xf32> to vector<8x8xf32>
    %122 = arith.subf %118, %121 : vector<8x8xf32>
    %123 = math.exp %122 : vector<8x8xf32>
    %cst_64 = arith.constant dense<0.000000e+00> : vector<8xf32>
    %124 = vector.multi_reduction <add>, %123, %cst_64 [1] : vector<8x8xf32> to vector<8xf32>
    %125 = vector.shape_cast %124 : vector<8xf32> to vector<8x1xf32>
    %126 = tpu.reciprocal %125 {approx = true} : vector<8x1xf32> -> vector<8x1xf32>
    %127 = vector.broadcast %126 : vector<8x1xf32> to vector<8x8xf32>
    %128 = arith.mulf %123, %127 : vector<8x8xf32>
    %cst_65 = arith.constant dense<0.000000e+00> : vector<8x8xf32>
    %129 = tpu.matmul %128, %115, %cst_65 {dimension_numbers = #tpu.dot_dimension_numbers<[1], [0], [0], [1], [0, 0, 1, 1], [], []>} : vector<8x8xf32>, vector<8x8xf32>, vector<8x8xf32> -> vector<8x8xf32>
    %130 = vector.extract_strided_slice %106 {offsets = [0, 8], sizes = [8, 8], strides = [1, 1]} : vector<8x32xf32> to vector<8x8xf32>
    %131 = vector.extract_strided_slice %109 {offsets = [0, 8], sizes = [8, 8], strides = [1, 1]} : vector<8x32xf32> to vector<8x8xf32>
    %132 = vector.extract_strided_slice %112 {offsets = [0, 8], sizes = [8, 8], strides = [1, 1]} : vector<8x32xf32> to vector<8x8xf32>
    %cst_66 = arith.constant dense<0.000000e+00> : vector<8x8xf32>
    %133 = tpu.matmul %130, %131, %cst_66 {dimension_numbers = #tpu.dot_dimension_numbers<[1], [1], [0], [0], [0, 0, 1, 0], [], []>} : vector<8x8xf32>, vector<8x8xf32>, vector<8x8xf32> -> vector<8x8xf32>
    %cst_67 = arith.constant 0.353553385 : f32
    %134 = vector.broadcast %cst_67 : f32 to vector<8x8xf32>
    %135 = arith.mulf %133, %134 : vector<8x8xf32>
    %cst_68 = arith.constant dense<0xFF800000> : vector<8xf32>
    %136 = vector.multi_reduction <maximumf>, %135, %cst_68 [1] : vector<8x8xf32> to vector<8xf32>
    %137 = vector.shape_cast %136 : vector<8xf32> to vector<8x1xf32>
    %138 = vector.broadcast %137 : vector<8x1xf32> to vector<8x8xf32>
    %139 = arith.subf %135, %138 : vector<8x8xf32>
    %140 = math.exp %139 : vector<8x8xf32>
    %cst_69 = arith.constant dense<0.000000e+00> : vector<8xf32>
    %141 = vector.multi_reduction <add>, %140, %cst_69 [1] : vector<8x8xf32> to vector<8xf32>
    %142 = vector.shape_cast %141 : vector<8xf32> to vector<8x1xf32>
    %143 = tpu.reciprocal %142 {approx = true} : vector<8x1xf32> -> vector<8x1xf32>
    %144 = vector.broadcast %143 : vector<8x1xf32> to vector<8x8xf32>
    %145 = arith.mulf %140, %144 : vector<8x8xf32>
    %cst_70 = arith.constant dense<0.000000e+00> : vector<8x8xf32>
    %146 = tpu.matmul %145, %132, %cst_70 {dimension_numbers = #tpu.dot_dimension_numbers<[1], [0], [0], [1], [0, 0, 1, 1], [], []>} : vector<8x8xf32>, vector<8x8xf32>, vector<8x8xf32> -> vector<8x8xf32>
    %147 = vector.extract_strided_slice %106 {offsets = [0, 16], sizes = [8, 8], strides = [1, 1]} : vector<8x32xf32> to vector<8x8xf32>
    %148 = vector.extract_strided_slice %109 {offsets = [0, 16], sizes = [8, 8], strides = [1, 1]} : vector<8x32xf32> to vector<8x8xf32>
    %149 = vector.extract_strided_slice %112 {offsets = [0, 16], sizes = [8, 8], strides = [1, 1]} : vector<8x32xf32> to vector<8x8xf32>
    %cst_71 = arith.constant dense<0.000000e+00> : vector<8x8xf32>
    %150 = tpu.matmul %147, %148, %cst_71 {dimension_numbers = #tpu.dot_dimension_numbers<[1], [1], [0], [0], [0, 0, 1, 0], [], []>} : vector<8x8xf32>, vector<8x8xf32>, vector<8x8xf32> -> vector<8x8xf32>
    %cst_72 = arith.constant 0.353553385 : f32
    %151 = vector.broadcast %cst_72 : f32 to vector<8x8xf32>
    %152 = arith.mulf %150, %151 : vector<8x8xf32>
    %cst_73 = arith.constant dense<0xFF800000> : vector<8xf32>
    %153 = vector.multi_reduction <maximumf>, %152, %cst_73 [1] : vector<8x8xf32> to vector<8xf32>
    %154 = vector.shape_cast %153 : vector<8xf32> to vector<8x1xf32>
    %155 = vector.broadcast %154 : vector<8x1xf32> to vector<8x8xf32>
    %156 = arith.subf %152, %155 : vector<8x8xf32>
    %157 = math.exp %156 : vector<8x8xf32>
    %cst_74 = arith.constant dense<0.000000e+00> : vector<8xf32>
    %158 = vector.multi_reduction <add>, %157, %cst_74 [1] : vector<8x8xf32> to vector<8xf32>
    %159 = vector.shape_cast %158 : vector<8xf32> to vector<8x1xf32>
    %160 = tpu.reciprocal %159 {approx = true} : vector<8x1xf32> -> vector<8x1xf32>
    %161 = vector.broadcast %160 : vector<8x1xf32> to vector<8x8xf32>
    %162 = arith.mulf %157, %161 : vector<8x8xf32>
    %cst_75 = arith.constant dense<0.000000e+00> : vector<8x8xf32>
    %163 = tpu.matmul %162, %149, %cst_75 {dimension_numbers = #tpu.dot_dimension_numbers<[1], [0], [0], [1], [0, 0, 1, 1], [], []>} : vector<8x8xf32>, vector<8x8xf32>, vector<8x8xf32> -> vector<8x8xf32>
    %164 = vector.extract_strided_slice %106 {offsets = [0, 24], sizes = [8, 8], strides = [1, 1]} : vector<8x32xf32> to vector<8x8xf32>
    %165 = vector.extract_strided_slice %109 {offsets = [0, 24], sizes = [8, 8], strides = [1, 1]} : vector<8x32xf32> to vector<8x8xf32>
    %166 = vector.extract_strided_slice %112 {offsets = [0, 24], sizes = [8, 8], strides = [1, 1]} : vector<8x32xf32> to vector<8x8xf32>
    %cst_76 = arith.constant dense<0.000000e+00> : vector<8x8xf32>
    %167 = tpu.matmul %164, %165, %cst_76 {dimension_numbers = #tpu.dot_dimension_numbers<[1], [1], [0], [0], [0, 0, 1, 0], [], []>} : vector<8x8xf32>, vector<8x8xf32>, vector<8x8xf32> -> vector<8x8xf32>
    %cst_77 = arith.constant 0.353553385 : f32
    %168 = vector.broadcast %cst_77 : f32 to vector<8x8xf32>
    %169 = arith.mulf %167, %168 : vector<8x8xf32>
    %cst_78 = arith.constant dense<0xFF800000> : vector<8xf32>
    %170 = vector.multi_reduction <maximumf>, %169, %cst_78 [1] : vector<8x8xf32> to vector<8xf32>
    %171 = vector.shape_cast %170 : vector<8xf32> to vector<8x1xf32>
    %172 = vector.broadcast %171 : vector<8x1xf32> to vector<8x8xf32>
    %173 = arith.subf %169, %172 : vector<8x8xf32>
    %174 = math.exp %173 : vector<8x8xf32>
    %cst_79 = arith.constant dense<0.000000e+00> : vector<8xf32>
    %175 = vector.multi_reduction <add>, %174, %cst_79 [1] : vector<8x8xf32> to vector<8xf32>
    %176 = vector.shape_cast %175 : vector<8xf32> to vector<8x1xf32>
    %177 = tpu.reciprocal %176 {approx = true} : vector<8x1xf32> -> vector<8x1xf32>
    %178 = vector.broadcast %177 : vector<8x1xf32> to vector<8x8xf32>
    %179 = arith.mulf %174, %178 : vector<8x8xf32>
    %cst_80 = arith.constant dense<0.000000e+00> : vector<8x8xf32>
    %180 = tpu.matmul %179, %166, %cst_80 {dimension_numbers = #tpu.dot_dimension_numbers<[1], [0], [0], [1], [0, 0, 1, 1], [], []>} : vector<8x8xf32>, vector<8x8xf32>, vector<8x8xf32> -> vector<8x8xf32>
    %181 = tpu.concatenate %129, %146, %163, %180 in 1 : vector<8x8xf32>, vector<8x8xf32>, vector<8x8xf32>, vector<8x8xf32> -> vector<8x32xf32>
    %cst_81 = arith.constant dense<0.000000e+00> : vector<8x32xf32>
    %182 = tpu.matmul %181, %3, %cst_81 {dimension_numbers = #tpu.dot_dimension_numbers<[1], [0], [0], [1], [0, 0, 1, 1], [], []>} : vector<8x32xf32>, vector<32x32xf32>, vector<8x32xf32> -> vector<8x32xf32>
    %183 = vector.broadcast %7 : vector<1x32xf32> to vector<8x32xf32>
    %184 = arith.addf %182, %183 : vector<8x32xf32>
    %c1_82 = arith.constant 1 : index
    %c0_83 = arith.constant 0 : index
    %c0_84 = arith.constant 0 : index
    %185 = vector.load %arg11[%c1_82, %c0_83, %c0_84] : memref<2x8x32xf32, #tpu.memory_space<vmem>>, vector<1x8x32xf32>
    %186 = vector.shape_cast %185 : vector<1x8x32xf32> to vector<8x32xf32>
    %187 = vector.shape_cast %184 : vector<8x32xf32> to vector<1x8x32xf32>
    tpu.vector_store %arg11[%c1_82, %c0_83, %c0_84], %187 {strides = array<i32>} : memref<2x8x32xf32, #tpu.memory_space<vmem>>, vector<1x8x32xf32>,
    return
  }
}

</mosaic_0001>

<llo_original>
// kernel: tpu_custom_call.1
$region0: #{tpu_custom_call.1}
  #allocation0 [shape = 'u32[]', space=smem, size = 0x4, offset = 0x4, fixed_abs, tag = 'smem constant byte address 0x4 - core index']
  #allocation1 [shape = 'u32[72,128]{1,0:T(1,128)}', space=vmem, size = 0x9000, scoped, tag = 'internal scratch']
  %s0 = inlined_call_operand.hbm [shape: f32[2,8,32], index: 0, kind: input, shape index: {}]
  %s1 = inlined_call_operand.hbm [shape: f32[2,8,32], index: 1, kind: input, shape index: {}]
  %s2 = inlined_call_operand.hbm [shape: f32[2,8,32], index: 2, kind: input, shape index: {}]
  %s3 = inlined_call_operand.hbm [shape: f32[32,32], index: 3, kind: input, shape index: {}]
  %s4 = inlined_call_operand.hbm [shape: f32[32,32], index: 4, kind: input, shape index: {}]
  %s5 = inlined_call_operand.hbm [shape: f32[32,32], index: 5, kind: input, shape index: {}]
  %s6 = inlined_call_operand.hbm [shape: f32[32,32], index: 6, kind: input, shape index: {}]
  %s7 = inlined_call_operand.vmem [shape: f32[1,32], index: 7, kind: input, shape index: {}]
  %s8 = inlined_call_operand.vmem [shape: f32[1,32], index: 8, kind: input, shape index: {}]
  %s9 = inlined_call_operand.vmem [shape: f32[1,32], index: 9, kind: input, shape index: {}]
  %s10 = inlined_call_operand.vmem [shape: f32[1,32], index: 10, kind: input, shape index: {}]
  %s11 = inlined_call_operand.hbm [shape: f32[2,8,32], index: 11, kind: output, shape index: {}]
  %s12 = sld [smem:[#allocation0]]
  $region82: #{tpu_custom_call.1} parent=0
    _
  %s14 = ssub.s32 1, %s12
  %s15 = scalar_select 0, %s14, %s12
  $region1: #{tpu_custom_call.1} parent=0
    #allocation2 [shape = 'u8[8192]{0}', space=vmem, size = 0x2000, scoped, tag = 'input window, operand 0, single buffered']
    #allocation3 [shape = 's32[1]{0}', space=sflag, size = 0x4, scoped, tag = 'scoped memory for tpu_custom_call.1']
    #allocation4 [shape = 's32[1]{0}', space=sflag, size = 0x4, scoped, tag = 'scoped memory for tpu_custom_call.1']
    #allocation5 [shape = 'u8[8192]{0}', space=vmem, size = 0x2000, scoped, tag = 'input window, operand 1, single buffered']
    #allocation6 [shape = 's32[1]{0}', space=sflag, size = 0x4, scoped, tag = 'scoped memory for tpu_custom_call.1']
    #allocation7 [shape = 'u8[8192]{0}', space=vmem, size = 0x2000, scoped, tag = 'input window, operand 2, single buffered']
    #allocation8 [shape = 'u8[16384]{0}', space=vmem, size = 0x4000, scoped, tag = 'input window, operand 3, single buffered']
    #allocation9 [shape = 's32[1]{0}', space=sflag, size = 0x4, scoped, tag = 'scoped memory for tpu_custom_call.1']
    #allocation10 [shape = 'u8[16384]{0}', space=vmem, size = 0x4000, scoped, tag = 'input window, operand 4, single buffered']
    #allocation11 [shape = 'u8[16384]{0}', space=vmem, size = 0x4000, scoped, tag = 'input window, operand 5, single buffered']
    #allocation12 [shape = 's32[1]{0}', space=sflag, size = 0x4, scoped, tag = 'scoped memory for tpu_custom_call.1']
    #allocation13 [shape = 'u8[16384]{0}', space=vmem, size = 0x4000, scoped, tag = 'input window, operand 6, single buffered']
    #allocation14 [shape = 'u8[8192]{0}', space=vmem, size = 0x2000, scoped, tag = 'output window, operand 0, single buffered']
    %16 = vsyncpa [#allocation3], 0
    %17 = vsyncpa [#allocation6], 0
    %18 = vsyncpa [#allocation9], 0
    %19 = vsyncpa [#allocation12], 0
    %20 = vsyncpa [#allocation4], 0
    // Predicated region
    $region2: #{tpu_custom_call.1} parent=1 // pred_check
      _
    $region3: #{tpu_custom_call.1} parent=1 // pred_check_branch
      %22 = sbr.rel (0) target = $region5
    $region4: #{tpu_custom_call.1} parent=1 // pred_region
      %24 = vsyncadd [#allocation3], 0
      %s25 = sshll.u32 %s0, 4
      %s26 = int_to_ptr.hbm [resolvable:$true] %s25
      %s27 = sshll.u32 [#allocation2], 4
      %s28 = int_to_ptr.vmem [resolvable:$true] %s27
      %33 = dma.hbm_to_vmem [thread:$0]  %s26, 256, %s28, [#allocation3], 128, 128, 8
    $region5: #{tpu_custom_call.1} parent=1 // pred_fallthru
      _
    // Predicated region
    $region6: #{tpu_custom_call.1} parent=1 // pred_check
      _
    $region7: #{tpu_custom_call.1} parent=1 // pred_check_branch
      %35 = sbr.rel (0) target = $region9
    $region8: #{tpu_custom_call.1} parent=1 // pred_region
      %37 = vsyncadd [#allocation6], 0
      %s38 = sshll.u32 %s1, 4
      %s39 = int_to_ptr.hbm [resolvable:$true] %s38
      %s40 = sshll.u32 [#allocation5], 4
      %s41 = int_to_ptr.vmem [resolvable:$true] %s40
      %46 = dma.hbm_to_vmem [thread:$0]  %s39, 256, %s41, [#allocation6], 128, 128, 8
    $region9: #{tpu_custom_call.1} parent=1 // pred_fallthru
      _
    // Predicated region
    $region10: #{tpu_custom_call.1} parent=1 // pred_check
      _
    $region11: #{tpu_custom_call.1} parent=1 // pred_check_branch
      %48 = sbr.rel (0) target = $region13
    $region12: #{tpu_custom_call.1} parent=1 // pred_region
      %50 = vsyncadd [#allocation6], 0
      %s51 = sshll.u32 %s2, 4
      %s52 = int_to_ptr.hbm [resolvable:$true] %s51
      %s53 = sshll.u32 [#allocation7], 4
      %s54 = int_to_ptr.vmem [resolvable:$true] %s53
      %59 = dma.hbm_to_vmem [thread:$0]  %s52, 256, %s54, [#allocation6], 128, 128, 8
    $region13: #{tpu_custom_call.1} parent=1 // pred_fallthru
      _
    // Predicated region
    $region14: #{tpu_custom_call.1} parent=1 // pred_check
      _
    $region15: #{tpu_custom_call.1} parent=1 // pred_check_branch
      %61 = sbr.rel (0) target = $region17
    $region16: #{tpu_custom_call.1} parent=1 // pred_region
      %63 = vsyncadd [#allocation9], 0
      %s64 = sshll.u32 %s3, 4
      %s65 = int_to_ptr.hbm [resolvable:$true] %s64
      %s66 = sshll.u32 [#allocation8], 4
      %s67 = int_to_ptr.vmem [resolvable:$true] %s66
      %72 = dma.hbm_to_vmem [thread:$0]  %s65, 512, %s67, [#allocation9], 128, 128, 8
    $region17: #{tpu_custom_call.1} parent=1 // pred_fallthru
      _
    // Predicated region
    $region18: #{tpu_custom_call.1} parent=1 // pred_check
      _
    $region19: #{tpu_custom_call.1} parent=1 // pred_check_branch
      %74 = sbr.rel (0) target = $region21
    $region20: #{tpu_custom_call.1} parent=1 // pred_region
      %76 = vsyncadd [#allocation9], 0
      %s77 = sshll.u32 %s4, 4
      %s78 = int_to_ptr.hbm [resolvable:$true] %s77
      %s79 = sshll.u32 [#allocation10], 4
      %s80 = int_to_ptr.vmem [resolvable:$true] %s79
      %85 = dma.hbm_to_vmem [thread:$0]  %s78, 512, %s80, [#allocation9], 128, 128, 8
    $region21: #{tpu_custom_call.1} parent=1 // pred_fallthru
      _
    // Predicated region
    $region22: #{tpu_custom_call.1} parent=1 // pred_check
      _
    $region23: #{tpu_custom_call.1} parent=1 // pred_check_branch
      %87 = sbr.rel (0) target = $region25
    $region24: #{tpu_custom_call.1} parent=1 // pred_region
      %89 = vsyncadd [#allocation12], 0
      %s90 = sshll.u32 %s5, 4
      %s91 = int_to_ptr.hbm [resolvable:$true] %s90
      %s92 = sshll.u32 [#allocation11], 4
      %s93 = int_to_ptr.vmem [resolvable:$true] %s92
      %98 = dma.hbm_to_vmem [thread:$0]  %s91, 512, %s93, [#allocation12], 128, 128, 8
    $region25: #{tpu_custom_call.1} parent=1 // pred_fallthru
      _
    // Predicated region
    $region26: #{tpu_custom_call.1} parent=1 // pred_check
      _
    $region27: #{tpu_custom_call.1} parent=1 // pred_check_branch
      %100 = sbr.rel (0) target = $region29
    $region28: #{tpu_custom_call.1} parent=1 // pred_region
      %102 = vsyncadd [#allocation12], 0
      %s103 = sshll.u32 %s6, 4
      %s104 = int_to_ptr.hbm [resolvable:$true] %s103
      %s105 = sshll.u32 [#allocation13], 4
      %s106 = int_to_ptr.vmem [resolvable:$true] %s105
      %111 = dma.hbm_to_vmem [thread:$0]  %s104, 512, %s106, [#allocation12], 128, 128, 8
    $region29: #{tpu_custom_call.1} parent=1 // pred_fallthru
      _
    // Predicated region
    $region30: #{tpu_custom_call.1} parent=1 // pred_check
      _
    $region31: #{tpu_custom_call.1} parent=1 // pred_check_branch
      %113 = sbr.rel (0) target = $region33
    $region32: #{tpu_custom_call.1} parent=1 // pred_region
      _
    $region33: #{tpu_custom_call.1} parent=1 // pred_fallthru
      _
    // Predicated region
    $region34: #{tpu_custom_call.1} parent=1 // pred_check
      _
    $region35: #{tpu_custom_call.1} parent=1 // pred_check_branch
      %115 = sbr.rel (0) target = $region37
    $region36: #{tpu_custom_call.1} parent=1 // pred_region
      _
    $region37: #{tpu_custom_call.1} parent=1 // pred_fallthru
      _
    // Predicated region
    $region38: #{tpu_custom_call.1} parent=1 // pred_check
      _
    $region39: #{tpu_custom_call.1} parent=1 // pred_check_branch
      %117 = sbr.rel (0) target = $region41
    $region40: #{tpu_custom_call.1} parent=1 // pred_region
      _
    $region41: #{tpu_custom_call.1} parent=1 // pred_fallthru
      _
    // Predicated region
    $region42: #{tpu_custom_call.1} parent=1 // pred_check
      _
    $region43: #{tpu_custom_call.1} parent=1 // pred_check_branch
      %119 = sbr.rel (0) target = $region45
    $region44: #{tpu_custom_call.1} parent=1 // pred_region
      _
    $region45: #{tpu_custom_call.1} parent=1 // pred_fallthru
      _
    // Predicated region
    $region46: #{tpu_custom_call.1} parent=1 // pred_check
      _
    $region47: #{tpu_custom_call.1} parent=1 // pred_check_branch
      %121 = sbr.rel (0) target = $region49
    $region48: #{tpu_custom_call.1} parent=1 // pred_region
      %123 = dma.done [#allocation3], 256
    $region49: #{tpu_custom_call.1} parent=1 // pred_fallthru
      _
    // Predicated region
    $region50: #{tpu_custom_call.1} parent=1 // pred_check
      _
    $region51: #{tpu_custom_call.1} parent=1 // pred_check_branch
      %125 = sbr.rel (0) target = $region53
    $region52: #{tpu_custom_call.1} parent=1 // pred_region
      %127 = dma.done [#allocation6], 256
    $region53: #{tpu_custom_call.1} parent=1 // pred_fallthru
      _
    // Predicated region
    $region54: #{tpu_custom_call.1} parent=1 // pred_check
      _
    $region55: #{tpu_custom_call.1} parent=1 // pred_check_branch
      %129 = sbr.rel (0) target = $region57
    $region56: #{tpu_custom_call.1} parent=1 // pred_region
      %131 = dma.done [#allocation6], 256
    $region57: #{tpu_custom_call.1} parent=1 // pred_fallthru
      _
    // Predicated region
    $region58: #{tpu_custom_call.1} parent=1 // pred_check
      _
    $region59: #{tpu_custom_call.1} parent=1 // pred_check_branch
      %133 = sbr.rel (0) target = $region61
    $region60: #{tpu_custom_call.1} parent=1 // pred_region
      %135 = dma.done [#allocation9], 512
    $region61: #{tpu_custom_call.1} parent=1 // pred_fallthru
      _
    // Predicated region
    $region62: #{tpu_custom_call.1} parent=1 // pred_check
      _
    $region63: #{tpu_custom_call.1} parent=1 // pred_check_branch
      %137 = sbr.rel (0) target = $region65
    $region64: #{tpu_custom_call.1} parent=1 // pred_region
      %139 = dma.done [#allocation9], 512
    $region65: #{tpu_custom_call.1} parent=1 // pred_fallthru
      _
    // Predicated region
    $region66: #{tpu_custom_call.1} parent=1 // pred_check
      _
    $region67: #{tpu_custom_call.1} parent=1 // pred_check_branch
      %141 = sbr.rel (0) target = $region69
    $region68: #{tpu_custom_call.1} parent=1 // pred_region
      %143 = dma.done [#allocation12], 512
    $region69: #{tpu_custom_call.1} parent=1 // pred_fallthru
      _
    // Predicated region
    $region70: #{tpu_custom_call.1} parent=1 // pred_check
      _
    $region71: #{tpu_custom_call.1} parent=1 // pred_check_branch
      %145 = sbr.rel (0) target = $region73
    $region72: #{tpu_custom_call.1} parent=1 // pred_region
      %147 = dma.done [#allocation12], 512
    $region73: #{tpu_custom_call.1} parent=1 // pred_fallthru
      _
    %v148 = vld [vmem:[#allocation8] sm:$0xff]
    %v149 = vld [vmem:[#allocation8 + $0x8] sm:$0xff]
    %v150 = vld [vmem:[#allocation8 + $0x10] sm:$0xff]
    %v151 = vld [vmem:[#allocation8 + $0x18] sm:$0xff]
    %v152 = vld [vmem:[#allocation10] sm:$0xff]
    %v153 = vld [vmem:[#allocation10 + $0x8] sm:$0xff]
    %v154 = vld [vmem:[#allocation10 + $0x10] sm:$0xff]
    %v155 = vld [vmem:[#allocation10 + $0x18] sm:$0xff]
    %v156 = vld [vmem:[#allocation11] sm:$0xff]
    %v157 = vld [vmem:[#allocation11 + $0x8] sm:$0xff]
    %v158 = vld [vmem:[#allocation11 + $0x10] sm:$0xff]
    %v159 = vld [vmem:[#allocation11 + $0x18] sm:$0xff]
    %v160 = vld [vmem:[#allocation13] sm:$0xff]
    %v161 = vld [vmem:[#allocation13 + $0x8] sm:$0xff]
    %v162 = vld [vmem:[#allocation13 + $0x10] sm:$0xff]
    %v163 = vld [vmem:[#allocation13 + $0x18] sm:$0xff]
    %v164 = vld [vmem:[%s7] sm:$0x1]
    %v165 = vld [vmem:[%s8] sm:$0x1]
    %v166 = vld [vmem:[%s9] sm:$0x1]
    %v167 = vld [vmem:[%s10] sm:$0x1]
    %v168 = vld [vmem:[#allocation2] sm:$0xff]
    %v169 = vld [vmem:[#allocation5] sm:$0xff]
    %v170 = vld [vmem:[#allocation7] sm:$0xff]
    %v172 = vperm.slane %v164, 0
    %vm174 = vcmask 261120
    %v176 = vsel %vm174, %v168, 0
    %178 = vmatpush.msra.mxu0 0.0
    %179 = vmatpush.msra.mxu0 0.0
    %180 = vmatpush.msra.mxu0 0.0
    %181 = vmatpush.msra.mxu0 0.0
    %182 = vmatpush.msra.mxu0 0.0
    %183 = vmatpush.msra.mxu0 0.0
    %184 = vmatpush.msra.mxu0 0.0
    %185 = vmatpush.msra.mxu0 0.0
    %186 = vmatpush.msra.mxu0 0.0
    %187 = vmatpush.msra.mxu0 0.0
    %188 = vmatpush.msra.mxu0 0.0
    %189 = vmatpush.msra.mxu0 0.0
    %190 = vmatpush.msra.mxu0 %v151
    %191 = vmatpush.msra.mxu0 %v150
    %192 = vmatpush.msra.mxu0 %v149
    %193 = vmatpush.msra.mxu0 %v148
    %194 = vmatmul.f32.gmra.mxu0 %v176
    %v195 = vpop.f32.mrf.mxu0
    %v196 = vadd.f32 %v172, %v195
    %197 = vdwg.mxu0
    %v199 = vperm.slane %v165, 0
    %v202 = vsel %vm174, %v169, 0
    %204 = vmatpush.msra.mxu0 0.0
    %205 = vmatpush.msra.mxu0 0.0
    %206 = vmatpush.msra.mxu0 0.0
    %207 = vmatpush.msra.mxu0 0.0
    %208 = vmatpush.msra.mxu0 0.0
    %209 = vmatpush.msra.mxu0 0.0
    %210 = vmatpush.msra.mxu0 0.0
    %211 = vmatpush.msra.mxu0 0.0
    %212 = vmatpush.msra.mxu0 0.0
    %213 = vmatpush.msra.mxu0 0.0
    %214 = vmatpush.msra.mxu0 0.0
    %215 = vmatpush.msra.mxu0 0.0
    %216 = vmatpush.msra.mxu0 %v155
    %217 = vmatpush.msra.mxu0 %v154
    %218 = vmatpush.msra.mxu0 %v153
    %219 = vmatpush.msra.mxu0 %v152
    %220 = vmatmul.f32.gmra.mxu0 %v202
    %v221 = vpop.f32.mrf.mxu0
    %v222 = vadd.f32 %v199, %v221
    %223 = vdwg.mxu0
    %v225 = vperm.slane %v166, 0
    %v228 = vsel %vm174, %v170, 0
    %230 = vmatpush.msra.mxu0 0.0
    %231 = vmatpush.msra.mxu0 0.0
    %232 = vmatpush.msra.mxu0 0.0
    %233 = vmatpush.msra.mxu0 0.0
    %234 = vmatpush.msra.mxu0 0.0
    %235 = vmatpush.msra.mxu0 0.0
    %236 = vmatpush.msra.mxu0 0.0
    %237 = vmatpush.msra.mxu0 0.0
    %238 = vmatpush.msra.mxu0 0.0
    %239 = vmatpush.msra.mxu0 0.0
    %240 = vmatpush.msra.mxu0 0.0
    %241 = vmatpush.msra.mxu0 0.0
    %242 = vmatpush.msra.mxu0 %v159
    %243 = vmatpush.msra.mxu0 %v158
    %244 = vmatpush.msra.mxu0 %v157
    %245 = vmatpush.msra.mxu0 %v156
    %246 = vmatmul.f32.gmra.mxu0 %v228
    %v247 = vpop.f32.mrf.mxu0
    %v248 = vadd.f32 %v225, %v247
    %249 = vdwg.mxu0
    %vm250 = vcmask 64512
    %v252 = vsel %vm250, %v196, 0
    %v255 = vsel %vm250, %v222, 0
    %257 = vmatpush.xpose.msra.mxu0 0.0
    %258 = vmatpush.xpose.msra.mxu0 0.0
    %259 = vmatpush.xpose.msra.mxu0 0.0
    %260 = vmatpush.xpose.msra.mxu0 0.0
    %261 = vmatpush.xpose.msra.mxu0 0.0
    %262 = vmatpush.xpose.msra.mxu0 0.0
    %263 = vmatpush.xpose.msra.mxu0 0.0
    %264 = vmatpush.xpose.msra.mxu0 0.0
    %265 = vmatpush.xpose.msra.mxu0 0.0
    %266 = vmatpush.xpose.msra.mxu0 0.0
    %267 = vmatpush.xpose.msra.mxu0 0.0
    %268 = vmatpush.xpose.msra.mxu0 0.0
    %269 = vmatpush.xpose.msra.mxu0 0.0
    %270 = vmatpush.xpose.msra.mxu0 0.0
    %271 = vmatpush.xpose.msra.mxu0 0.0
    %272 = vmatpush.xpose.msra.mxu0 %v255
    %273 = vmatmul.f32.gmra.mxu0 %v252
    %v274 = vpop.f32.mrf.mxu0
    %v275 = vadd.f32 0.0, %v274
    %276 = vdwg.mxu0
    %v277 = vmul.f32 %v275, 0.35355338
    %v278 = vsel %vm250, %v277, -inf
    %279 = vmax.xlane.f32.xlu0 %v278
    %v280 = vpop.xlane.xlu0 %279
    %v281 = vsub.f32 %v277, %v280
    %v282 = vmul.f32 %v281, 1.442695
    %v283 = vpow.pop %v282
    %v284 = vsel %vm250, %v283, 0.0
    %285 = vadd.xlane.f32.xlu0 %v284
    %v286 = vpop.xlane.xlu0 %285
    %v287 = vrcp.pop %v286
    %v288 = vmul.f32 %v283, %v287
    %v290 = vsel %vm250, %v288, 0
    %292 = vmatpush.msra.mxu0 0.0
    %293 = vmatpush.msra.mxu0 0.0
    %294 = vmatpush.msra.mxu0 0.0
    %295 = vmatpush.msra.mxu0 0.0
    %296 = vmatpush.msra.mxu0 0.0
    %297 = vmatpush.msra.mxu0 0.0
    %298 = vmatpush.msra.mxu0 0.0
    %299 = vmatpush.msra.mxu0 0.0
    %300 = vmatpush.msra.mxu0 0.0
    %301 = vmatpush.msra.mxu0 0.0
    %302 = vmatpush.msra.mxu0 0.0
    %303 = vmatpush.msra.mxu0 0.0
    %304 = vmatpush.msra.mxu0 0.0
    %305 = vmatpush.msra.mxu0 0.0
    %306 = vmatpush.msra.mxu0 0.0
    %307 = vmatpush.msra.mxu0 %v248
    %308 = vmatmul.f32.gmra.mxu0 %v290
    %v309 = vpop.f32.mrf.mxu0
    %v310 = vadd.f32 0.0, %v309
    %311 = vdwg.mxu0
    %312 = vrot.lane.b32.xlu0 %v196, 120
    %v313 = vpop.permute.xlu0 %312
    %314 = vrot.lane.b32.xlu0 %v222, 120
    %v315 = vpop.permute.xlu0 %314
    %v316 = vsel %vm250, %v313, 0
    %v318 = vsel %vm250, %v315, 0
    %320 = vmatpush.xpose.msra.mxu0 0.0
    %321 = vmatpush.xpose.msra.mxu0 0.0
    %322 = vmatpush.xpose.msra.mxu0 0.0
    %323 = vmatpush.xpose.msra.mxu0 0.0
    %324 = vmatpush.xpose.msra.mxu0 0.0
    %325 = vmatpush.xpose.msra.mxu0 0.0
    %326 = vmatpush.xpose.msra.mxu0 0.0
    %327 = vmatpush.xpose.msra.mxu0 0.0
    %328 = vmatpush.xpose.msra.mxu0 0.0
    %329 = vmatpush.xpose.msra.mxu0 0.0
    %330 = vmatpush.xpose.msra.mxu0 0.0
    %331 = vmatpush.xpose.msra.mxu0 0.0
    %332 = vmatpush.xpose.msra.mxu0 0.0
    %333 = vmatpush.xpose.msra.mxu0 0.0
    %334 = vmatpush.xpose.msra.mxu0 0.0
    %335 = vmatpush.xpose.msra.mxu0 %v318
    %336 = vmatmul.f32.gmra.mxu0 %v316
    %v337 = vpop.f32.mrf.mxu0
    %v338 = vadd.f32 0.0, %v337
    %339 = vdwg.mxu0
    %v340 = vmul.f32 %v338, 0.35355338
    %v341 = vsel %vm250, %v340, -inf
    %342 = vmax.xlane.f32.xlu0 %v341
    %v343 = vpop.xlane.xlu0 %342
    %v344 = vsub.f32 %v340, %v343
    %v345 = vmul.f32 %v344, 1.442695
    %v346 = vpow.pop %v345
    %v347 = vsel %vm250, %v346, 0.0
    %348 = vadd.xlane.f32.xlu0 %v347
    %v349 = vpop.xlane.xlu0 %348
    %v350 = vrcp.pop %v349
    %v351 = vmul.f32 %v346, %v350
    %353 = vrot.lane.b32.xlu0 %v248, 120
    %v354 = vpop.permute.xlu0 %353
    %v357 = vsel %vm250, %v351, 0
    %359 = vmatpush.msra.mxu0 0.0
    %360 = vmatpush.msra.mxu0 0.0
    %361 = vmatpush.msra.mxu0 0.0
    %362 = vmatpush.msra.mxu0 0.0
    %363 = vmatpush.msra.mxu0 0.0
    %364 = vmatpush.msra.mxu0 0.0
    %365 = vmatpush.msra.mxu0 0.0
    %366 = vmatpush.msra.mxu0 0.0
    %367 = vmatpush.msra.mxu0 0.0
    %368 = vmatpush.msra.mxu0 0.0
    %369 = vmatpush.msra.mxu0 0.0
    %370 = vmatpush.msra.mxu0 0.0
    %371 = vmatpush.msra.mxu0 0.0
    %372 = vmatpush.msra.mxu0 0.0
    %373 = vmatpush.msra.mxu0 0.0
    %374 = vmatpush.msra.mxu0 %v354
    %375 = vmatmul.f32.gmra.mxu0 %v357
    %v376 = vpop.f32.mrf.mxu0
    %v377 = vadd.f32 0.0, %v376
    %378 = vdwg.mxu0
    %379 = vrot.lane.b32.xlu0 %v196, 112
    %v380 = vpop.permute.xlu0 %379
    %381 = vrot.lane.b32.xlu0 %v222, 112
    %v382 = vpop.permute.xlu0 %381
    %v383 = vsel %vm250, %v380, 0
    %v385 = vsel %vm250, %v382, 0
    %387 = vmatpush.xpose.msra.mxu0 0.0
    %388 = vmatpush.xpose.msra.mxu0 0.0
    %389 = vmatpush.xpose.msra.mxu0 0.0
    %390 = vmatpush.xpose.msra.mxu0 0.0
    %391 = vmatpush.xpose.msra.mxu0 0.0
    %392 = vmatpush.xpose.msra.mxu0 0.0
    %393 = vmatpush.xpose.msra.mxu0 0.0
    %394 = vmatpush.xpose.msra.mxu0 0.0
    %395 = vmatpush.xpose.msra.mxu0 0.0
    %396 = vmatpush.xpose.msra.mxu0 0.0
    %397 = vmatpush.xpose.msra.mxu0 0.0
    %398 = vmatpush.xpose.msra.mxu0 0.0
    %399 = vmatpush.xpose.msra.mxu0 0.0
    %400 = vmatpush.xpose.msra.mxu0 0.0
    %401 = vmatpush.xpose.msra.mxu0 0.0
    %402 = vmatpush.xpose.msra.mxu0 %v385
    %403 = vmatmul.f32.gmra.mxu0 %v383
    %v404 = vpop.f32.mrf.mxu0
    %v405 = vadd.f32 0.0, %v404
    %406 = vdwg.mxu0
    %v407 = vmul.f32 %v405, 0.35355338
    %v408 = vsel %vm250, %v407, -inf
    %409 = vmax.xlane.f32.xlu0 %v408
    %v410 = vpop.xlane.xlu0 %409
    %v411 = vsub.f32 %v407, %v410
    %v412 = vmul.f32 %v411, 1.442695
    %v413 = vpow.pop %v412
    %v414 = vsel %vm250, %v413, 0.0
    %415 = vadd.xlane.f32.xlu0 %v414
    %v416 = vpop.xlane.xlu0 %415
    %v417 = vrcp.pop %v416
    %v418 = vmul.f32 %v413, %v417
    %419 = vrot.lane.b32.xlu0 %v248, 112
    %v420 = vpop.permute.xlu0 %419
    %v423 = vsel %vm250, %v418, 0
    %425 = vmatpush.msra.mxu0 0.0
    %426 = vmatpush.msra.mxu0 0.0
    %427 = vmatpush.msra.mxu0 0.0
    %428 = vmatpush.msra.mxu0 0.0
    %429 = vmatpush.msra.mxu0 0.0
    %430 = vmatpush.msra.mxu0 0.0
    %431 = vmatpush.msra.mxu0 0.0
    %432 = vmatpush.msra.mxu0 0.0
    %433 = vmatpush.msra.mxu0 0.0
    %434 = vmatpush.msra.mxu0 0.0
    %435 = vmatpush.msra.mxu0 0.0
    %436 = vmatpush.msra.mxu0 0.0
    %437 = vmatpush.msra.mxu0 0.0
    %438 = vmatpush.msra.mxu0 0.0
    %439 = vmatpush.msra.mxu0 0.0
    %440 = vmatpush.msra.mxu0 %v420
    %441 = vmatmul.f32.gmra.mxu0 %v423
    %v442 = vpop.f32.mrf.mxu0
    %v443 = vadd.f32 0.0, %v442
    %444 = vdwg.mxu0
    %445 = vrot.lane.b32.xlu0 %v196, 104
    %v446 = vpop.permute.xlu0 %445
    %447 = vrot.lane.b32.xlu0 %v222, 104
    %v448 = vpop.permute.xlu0 %447
    %v449 = vsel %vm250, %v446, 0
    %v451 = vsel %vm250, %v448, 0
    %453 = vmatpush.xpose.msra.mxu0 0.0
    %454 = vmatpush.xpose.msra.mxu0 0.0
    %455 = vmatpush.xpose.msra.mxu0 0.0
    %456 = vmatpush.xpose.msra.mxu0 0.0
    %457 = vmatpush.xpose.msra.mxu0 0.0
    %458 = vmatpush.xpose.msra.mxu0 0.0
    %459 = vmatpush.xpose.msra.mxu0 0.0
    %460 = vmatpush.xpose.msra.mxu0 0.0
    %461 = vmatpush.xpose.msra.mxu0 0.0
    %462 = vmatpush.xpose.msra.mxu0 0.0
    %463 = vmatpush.xpose.msra.mxu0 0.0
    %464 = vmatpush.xpose.msra.mxu0 0.0
    %465 = vmatpush.xpose.msra.mxu0 0.0
    %466 = vmatpush.xpose.msra.mxu0 0.0
    %467 = vmatpush.xpose.msra.mxu0 0.0
    %468 = vmatpush.xpose.msra.mxu0 %v451
    %469 = vmatmul.f32.gmra.mxu0 %v449
    %v470 = vpop.f32.mrf.mxu0
    %v471 = vadd.f32 0.0, %v470
    %472 = vdwg.mxu0
    %v473 = vmul.f32 %v471, 0.35355338
    %v474 = vsel %vm250, %v473, -inf
    %475 = vmax.xlane.f32.xlu0 %v474
    %v476 = vpop.xlane.xlu0 %475
    %v477 = vsub.f32 %v473, %v476
    %v478 = vmul.f32 %v477, 1.442695
    %v479 = vpow.pop %v478
    %v480 = vsel %vm250, %v479, 0.0
    %481 = vadd.xlane.f32.xlu0 %v480
    %v482 = vpop.xlane.xlu0 %481
    %v483 = vrcp.pop %v482
    %v484 = vmul.f32 %v479, %v483
    %485 = vrot.lane.b32.xlu0 %v248, 104
    %v486 = vpop.permute.xlu0 %485
    %v489 = vsel %vm250, %v484, 0
    %491 = vmatpush.msra.mxu0 0.0
    %492 = vmatpush.msra.mxu0 0.0
    %493 = vmatpush.msra.mxu0 0.0
    %494 = vmatpush.msra.mxu0 0.0
    %495 = vmatpush.msra.mxu0 0.0
    %496 = vmatpush.msra.mxu0 0.0
    %497 = vmatpush.msra.mxu0 0.0
    %498 = vmatpush.msra.mxu0 0.0
    %499 = vmatpush.msra.mxu0 0.0
    %500 = vmatpush.msra.mxu0 0.0
    %501 = vmatpush.msra.mxu0 0.0
    %502 = vmatpush.msra.mxu0 0.0
    %503 = vmatpush.msra.mxu0 0.0
    %504 = vmatpush.msra.mxu0 0.0
    %505 = vmatpush.msra.mxu0 0.0
    %506 = vmatpush.msra.mxu0 %v486
    %507 = vmatmul.f32.gmra.mxu0 %v489
    %v508 = vpop.f32.mrf.mxu0
    %v509 = vadd.f32 0.0, %v508
    %510 = vdwg.mxu0
    %512 = vrot.lane.b32.xlu0 %v377, 8
    %v513 = vpop.permute.xlu0 %512
    %516 = vrot.lane.b32.xlu0 %v443, 16
    %v517 = vpop.permute.xlu0 %516
    %520 = vrot.lane.b32.xlu0 %v509, 24
    %v521 = vpop.permute.xlu0 %520
    %v523 = vsel %vm250, %v310, %v513
    %vm524 = vcmask 130048
    %v525 = vsel %vm524, %v523, %v517
    %vm526 = vcmask 195584
    %v527 = vsel %vm526, %v525, %v521
    %v529 = vperm.slane %v167, 0
    %v532 = vsel %vm174, %v527, 0
    %534 = vmatpush.msra.mxu0 0.0
    %535 = vmatpush.msra.mxu0 0.0
    %536 = vmatpush.msra.mxu0 0.0
    %537 = vmatpush.msra.mxu0 0.0
    %538 = vmatpush.msra.mxu0 0.0
    %539 = vmatpush.msra.mxu0 0.0
    %540 = vmatpush.msra.mxu0 0.0
    %541 = vmatpush.msra.mxu0 0.0
    %542 = vmatpush.msra.mxu0 0.0
    %543 = vmatpush.msra.mxu0 0.0
    %544 = vmatpush.msra.mxu0 0.0
    %545 = vmatpush.msra.mxu0 0.0
    %546 = vmatpush.msra.mxu0 %v163
    %547 = vmatpush.msra.mxu0 %v162
    %548 = vmatpush.msra.mxu0 %v161
    %549 = vmatpush.msra.mxu0 %v160
    %550 = vmatmul.f32.gmra.mxu0 %v532
    %v551 = vpop.f32.mrf.mxu0
    %v552 = vadd.f32 %v529, %v551
    %553 = vdwg.mxu0
    %554 = vst.msk [vmem:[#allocation14] sm:$0xff] %vm174, %v552
    %s555 = scalar_lea.vmem [#allocation2], 8
    %v556 = vld [vmem:[%s555] sm:$0xff]
    %s557 = scalar_lea.vmem [#allocation5], 8
    %v558 = vld [vmem:[%s557] sm:$0xff]
    %s559 = scalar_lea.vmem [#allocation7], 8
    %v560 = vld [vmem:[%s559] sm:$0xff]
    %v562 = vsel %vm174, %v556, 0
    %564 = vmatpush.msra.mxu0 0.0
    %565 = vmatpush.msra.mxu0 0.0
    %566 = vmatpush.msra.mxu0 0.0
    %567 = vmatpush.msra.mxu0 0.0
    %568 = vmatpush.msra.mxu0 0.0
    %569 = vmatpush.msra.mxu0 0.0
    %570 = vmatpush.msra.mxu0 0.0
    %571 = vmatpush.msra.mxu0 0.0
    %572 = vmatpush.msra.mxu0 0.0
    %573 = vmatpush.msra.mxu0 0.0
    %574 = vmatpush.msra.mxu0 0.0
    %575 = vmatpush.msra.mxu0 0.0
    %576 = vmatpush.msra.mxu0 %v151
    %577 = vmatpush.msra.mxu0 %v150
    %578 = vmatpush.msra.mxu0 %v149
    %579 = vmatpush.msra.mxu0 %v148
    %580 = vmatmul.f32.gmra.mxu0 %v562
    %v581 = vpop.f32.mrf.mxu0
    %v582 = vadd.f32 %v172, %v581
    %583 = vdwg.mxu0
    %v585 = vsel %vm174, %v558, 0
    %587 = vmatpush.msra.mxu0 0.0
    %588 = vmatpush.msra.mxu0 0.0
    %589 = vmatpush.msra.mxu0 0.0
    %590 = vmatpush.msra.mxu0 0.0
    %591 = vmatpush.msra.mxu0 0.0
    %592 = vmatpush.msra.mxu0 0.0
    %593 = vmatpush.msra.mxu0 0.0
    %594 = vmatpush.msra.mxu0 0.0
    %595 = vmatpush.msra.mxu0 0.0
    %596 = vmatpush.msra.mxu0 0.0
    %597 = vmatpush.msra.mxu0 0.0
    %598 = vmatpush.msra.mxu0 0.0
    %599 = vmatpush.msra.mxu0 %v155
    %600 = vmatpush.msra.mxu0 %v154
    %601 = vmatpush.msra.mxu0 %v153
    %602 = vmatpush.msra.mxu0 %v152
    %603 = vmatmul.f32.gmra.mxu0 %v585
    %v604 = vpop.f32.mrf.mxu0
    %v605 = vadd.f32 %v199, %v604
    %606 = vdwg.mxu0
    %v608 = vsel %vm174, %v560, 0
    %610 = vmatpush.msra.mxu0 0.0
    %611 = vmatpush.msra.mxu0 0.0
    %612 = vmatpush.msra.mxu0 0.0
    %613 = vmatpush.msra.mxu0 0.0
    %614 = vmatpush.msra.mxu0 0.0
    %615 = vmatpush.msra.mxu0 0.0
    %616 = vmatpush.msra.mxu0 0.0
    %617 = vmatpush.msra.mxu0 0.0
    %618 = vmatpush.msra.mxu0 0.0
    %619 = vmatpush.msra.mxu0 0.0
    %620 = vmatpush.msra.mxu0 0.0
    %621 = vmatpush.msra.mxu0 0.0
    %622 = vmatpush.msra.mxu0 %v159
    %623 = vmatpush.msra.mxu0 %v158
    %624 = vmatpush.msra.mxu0 %v157
    %625 = vmatpush.msra.mxu0 %v156
    %626 = vmatmul.f32.gmra.mxu0 %v608
    %v627 = vpop.f32.mrf.mxu0
    %v628 = vadd.f32 %v225, %v627
    %629 = vdwg.mxu0
    %v631 = vsel %vm250, %v582, 0
    %v634 = vsel %vm250, %v605, 0
    %636 = vmatpush.xpose.msra.mxu0 0.0
    %637 = vmatpush.xpose.msra.mxu0 0.0
    %638 = vmatpush.xpose.msra.mxu0 0.0
    %639 = vmatpush.xpose.msra.mxu0 0.0
    %640 = vmatpush.xpose.msra.mxu0 0.0
    %641 = vmatpush.xpose.msra.mxu0 0.0
    %642 = vmatpush.xpose.msra.mxu0 0.0
    %643 = vmatpush.xpose.msra.mxu0 0.0
    %644 = vmatpush.xpose.msra.mxu0 0.0
    %645 = vmatpush.xpose.msra.mxu0 0.0
    %646 = vmatpush.xpose.msra.mxu0 0.0
    %647 = vmatpush.xpose.msra.mxu0 0.0
    %648 = vmatpush.xpose.msra.mxu0 0.0
    %649 = vmatpush.xpose.msra.mxu0 0.0
    %650 = vmatpush.xpose.msra.mxu0 0.0
    %651 = vmatpush.xpose.msra.mxu0 %v634
    %652 = vmatmul.f32.gmra.mxu0 %v631
    %v653 = vpop.f32.mrf.mxu0
    %v654 = vadd.f32 0.0, %v653
    %655 = vdwg.mxu0
    %v656 = vmul.f32 %v654, 0.35355338
    %v657 = vsel %vm250, %v656, -inf
    %658 = vmax.xlane.f32.xlu0 %v657
    %v659 = vpop.xlane.xlu0 %658
    %v660 = vsub.f32 %v656, %v659
    %v661 = vmul.f32 %v660, 1.442695
    %v662 = vpow.pop %v661
    %v663 = vsel %vm250, %v662, 0.0
    %664 = vadd.xlane.f32.xlu0 %v663
    %v665 = vpop.xlane.xlu0 %664
    %v666 = vrcp.pop %v665
    %v667 = vmul.f32 %v662, %v666
    %v669 = vsel %vm250, %v667, 0
    %671 = vmatpush.msra.mxu0 0.0
    %672 = vmatpush.msra.mxu0 0.0
    %673 = vmatpush.msra.mxu0 0.0
    %674 = vmatpush.msra.mxu0 0.0
    %675 = vmatpush.msra.mxu0 0.0
    %676 = vmatpush.msra.mxu0 0.0
    %677 = vmatpush.msra.mxu0 0.0
    %678 = vmatpush.msra.mxu0 0.0
    %679 = vmatpush.msra.mxu0 0.0
    %680 = vmatpush.msra.mxu0 0.0
    %681 = vmatpush.msra.mxu0 0.0
    %682 = vmatpush.msra.mxu0 0.0
    %683 = vmatpush.msra.mxu0 0.0
    %684 = vmatpush.msra.mxu0 0.0
    %685 = vmatpush.msra.mxu0 0.0
    %686 = vmatpush.msra.mxu0 %v628
    %687 = vmatmul.f32.gmra.mxu0 %v669
    %v688 = vpop.f32.mrf.mxu0
    %v689 = vadd.f32 0.0, %v688
    %690 = vdwg.mxu0
    %691 = vrot.lane.b32.xlu0 %v582, 120
    %v692 = vpop.permute.xlu0 %691
    %693 = vrot.lane.b32.xlu0 %v605, 120
    %v694 = vpop.permute.xlu0 %693
    %v695 = vsel %vm250, %v692, 0
    %v697 = vsel %vm250, %v694, 0
    %699 = vmatpush.xpose.msra.mxu0 0.0
    %700 = vmatpush.xpose.msra.mxu0 0.0
    %701 = vmatpush.xpose.msra.mxu0 0.0
    %702 = vmatpush.xpose.msra.mxu0 0.0
    %703 = vmatpush.xpose.msra.mxu0 0.0
    %704 = vmatpush.xpose.msra.mxu0 0.0
    %705 = vmatpush.xpose.msra.mxu0 0.0
    %706 = vmatpush.xpose.msra.mxu0 0.0
    %707 = vmatpush.xpose.msra.mxu0 0.0
    %708 = vmatpush.xpose.msra.mxu0 0.0
    %709 = vmatpush.xpose.msra.mxu0 0.0
    %710 = vmatpush.xpose.msra.mxu0 0.0
    %711 = vmatpush.xpose.msra.mxu0 0.0
    %712 = vmatpush.xpose.msra.mxu0 0.0
    %713 = vmatpush.xpose.msra.mxu0 0.0
    %714 = vmatpush.xpose.msra.mxu0 %v697
    %715 = vmatmul.f32.gmra.mxu0 %v695
    %v716 = vpop.f32.mrf.mxu0
    %v717 = vadd.f32 0.0, %v716
    %718 = vdwg.mxu0
    %v719 = vmul.f32 %v717, 0.35355338
    %v720 = vsel %vm250, %v719, -inf
    %721 = vmax.xlane.f32.xlu0 %v720
    %v722 = vpop.xlane.xlu0 %721
    %v723 = vsub.f32 %v719, %v722
    %v724 = vmul.f32 %v723, 1.442695
    %v725 = vpow.pop %v724
    %v726 = vsel %vm250, %v725, 0.0
    %727 = vadd.xlane.f32.xlu0 %v726
    %v728 = vpop.xlane.xlu0 %727
    %v729 = vrcp.pop %v728
    %v730 = vmul.f32 %v725, %v729
    %732 = vrot.lane.b32.xlu0 %v628, 120
    %v733 = vpop.permute.xlu0 %732
    %v736 = vsel %vm250, %v730, 0
    %738 = vmatpush.msra.mxu0 0.0
    %739 = vmatpush.msra.mxu0 0.0
    %740 = vmatpush.msra.mxu0 0.0
    %741 = vmatpush.msra.mxu0 0.0
    %742 = vmatpush.msra.mxu0 0.0
    %743 = vmatpush.msra.mxu0 0.0
    %744 = vmatpush.msra.mxu0 0.0
    %745 = vmatpush.msra.mxu0 0.0
    %746 = vmatpush.msra.mxu0 0.0
    %747 = vmatpush.msra.mxu0 0.0
    %748 = vmatpush.msra.mxu0 0.0
    %749 = vmatpush.msra.mxu0 0.0
    %750 = vmatpush.msra.mxu0 0.0
    %751 = vmatpush.msra.mxu0 0.0
    %752 = vmatpush.msra.mxu0 0.0
    %753 = vmatpush.msra.mxu0 %v733
    %754 = vmatmul.f32.gmra.mxu0 %v736
    %v755 = vpop.f32.mrf.mxu0
    %v756 = vadd.f32 0.0, %v755
    %757 = vdwg.mxu0
    %758 = vrot.lane.b32.xlu0 %v582, 112
    %v759 = vpop.permute.xlu0 %758
    %760 = vrot.lane.b32.xlu0 %v605, 112
    %v761 = vpop.permute.xlu0 %760
    %v762 = vsel %vm250, %v759, 0
    %v764 = vsel %vm250, %v761, 0
    %766 = vmatpush.xpose.msra.mxu0 0.0
    %767 = vmatpush.xpose.msra.mxu0 0.0
    %768 = vmatpush.xpose.msra.mxu0 0.0
    %769 = vmatpush.xpose.msra.mxu0 0.0
    %770 = vmatpush.xpose.msra.mxu0 0.0
    %771 = vmatpush.xpose.msra.mxu0 0.0
    %772 = vmatpush.xpose.msra.mxu0 0.0
    %773 = vmatpush.xpose.msra.mxu0 0.0
    %774 = vmatpush.xpose.msra.mxu0 0.0
    %775 = vmatpush.xpose.msra.mxu0 0.0
    %776 = vmatpush.xpose.msra.mxu0 0.0
    %777 = vmatpush.xpose.msra.mxu0 0.0
    %778 = vmatpush.xpose.msra.mxu0 0.0
    %779 = vmatpush.xpose.msra.mxu0 0.0
    %780 = vmatpush.xpose.msra.mxu0 0.0
    %781 = vmatpush.xpose.msra.mxu0 %v764
    %782 = vmatmul.f32.gmra.mxu0 %v762
    %v783 = vpop.f32.mrf.mxu0
    %v784 = vadd.f32 0.0, %v783
    %785 = vdwg.mxu0
    %v786 = vmul.f32 %v784, 0.35355338
    %v787 = vsel %vm250, %v786, -inf
    %788 = vmax.xlane.f32.xlu0 %v787
    %v789 = vpop.xlane.xlu0 %788
    %v790 = vsub.f32 %v786, %v789
    %v791 = vmul.f32 %v790, 1.442695
    %v792 = vpow.pop %v791
    %v793 = vsel %vm250, %v792, 0.0
    %794 = vadd.xlane.f32.xlu0 %v793
    %v795 = vpop.xlane.xlu0 %794
    %v796 = vrcp.pop %v795
    %v797 = vmul.f32 %v792, %v796
    %798 = vrot.lane.b32.xlu0 %v628, 112
    %v799 = vpop.permute.xlu0 %798
    %v802 = vsel %vm250, %v797, 0
    %804 = vmatpush.msra.mxu0 0.0
    %805 = vmatpush.msra.mxu0 0.0
    %806 = vmatpush.msra.mxu0 0.0
    %807 = vmatpush.msra.mxu0 0.0
    %808 = vmatpush.msra.mxu0 0.0
    %809 = vmatpush.msra.mxu0 0.0
    %810 = vmatpush.msra.mxu0 0.0
    %811 = vmatpush.msra.mxu0 0.0
    %812 = vmatpush.msra.mxu0 0.0
    %813 = vmatpush.msra.mxu0 0.0
    %814 = vmatpush.msra.mxu0 0.0
    %815 = vmatpush.msra.mxu0 0.0
    %816 = vmatpush.msra.mxu0 0.0
    %817 = vmatpush.msra.mxu0 0.0
    %818 = vmatpush.msra.mxu0 0.0
    %819 = vmatpush.msra.mxu0 %v799
    %820 = vmatmul.f32.gmra.mxu0 %v802
    %v821 = vpop.f32.mrf.mxu0
    %v822 = vadd.f32 0.0, %v821
    %823 = vdwg.mxu0
    %824 = vrot.lane.b32.xlu0 %v582, 104
    %v825 = vpop.permute.xlu0 %824
    %826 = vrot.lane.b32.xlu0 %v605, 104
    %v827 = vpop.permute.xlu0 %826
    %v828 = vsel %vm250, %v825, 0
    %v830 = vsel %vm250, %v827, 0
    %832 = vmatpush.xpose.msra.mxu0 0.0
    %833 = vmatpush.xpose.msra.mxu0 0.0
    %834 = vmatpush.xpose.msra.mxu0 0.0
    %835 = vmatpush.xpose.msra.mxu0 0.0
    %836 = vmatpush.xpose.msra.mxu0 0.0
    %837 = vmatpush.xpose.msra.mxu0 0.0
    %838 = vmatpush.xpose.msra.mxu0 0.0
    %839 = vmatpush.xpose.msra.mxu0 0.0
    %840 = vmatpush.xpose.msra.mxu0 0.0
    %841 = vmatpush.xpose.msra.mxu0 0.0
    %842 = vmatpush.xpose.msra.mxu0 0.0
    %843 = vmatpush.xpose.msra.mxu0 0.0
    %844 = vmatpush.xpose.msra.mxu0 0.0
    %845 = vmatpush.xpose.msra.mxu0 0.0
    %846 = vmatpush.xpose.msra.mxu0 0.0
    %847 = vmatpush.xpose.msra.mxu0 %v830
    %848 = vmatmul.f32.gmra.mxu0 %v828
    %v849 = vpop.f32.mrf.mxu0
    %v850 = vadd.f32 0.0, %v849
    %851 = vdwg.mxu0
    %v852 = vmul.f32 %v850, 0.35355338
    %v853 = vsel %vm250, %v852, -inf
    %854 = vmax.xlane.f32.xlu0 %v853
    %v855 = vpop.xlane.xlu0 %854
    %v856 = vsub.f32 %v852, %v855
    %v857 = vmul.f32 %v856, 1.442695
    %v858 = vpow.pop %v857
    %v859 = vsel %vm250, %v858, 0.0
    %860 = vadd.xlane.f32.xlu0 %v859
    %v861 = vpop.xlane.xlu0 %860
    %v862 = vrcp.pop %v861
    %v863 = vmul.f32 %v858, %v862
    %864 = vrot.lane.b32.xlu0 %v628, 104
    %v865 = vpop.permute.xlu0 %864
    %v868 = vsel %vm250, %v863, 0
    %870 = vmatpush.msra.mxu0 0.0
    %871 = vmatpush.msra.mxu0 0.0
    %872 = vmatpush.msra.mxu0 0.0
    %873 = vmatpush.msra.mxu0 0.0
    %874 = vmatpush.msra.mxu0 0.0
    %875 = vmatpush.msra.mxu0 0.0
    %876 = vmatpush.msra.mxu0 0.0
    %877 = vmatpush.msra.mxu0 0.0
    %878 = vmatpush.msra.mxu0 0.0
    %879 = vmatpush.msra.mxu0 0.0
    %880 = vmatpush.msra.mxu0 0.0
    %881 = vmatpush.msra.mxu0 0.0
    %882 = vmatpush.msra.mxu0 0.0
    %883 = vmatpush.msra.mxu0 0.0
    %884 = vmatpush.msra.mxu0 0.0
    %885 = vmatpush.msra.mxu0 %v865
    %886 = vmatmul.f32.gmra.mxu0 %v868
    %v887 = vpop.f32.mrf.mxu0
    %v888 = vadd.f32 0.0, %v887
    %889 = vdwg.mxu0
    %891 = vrot.lane.b32.xlu0 %v756, 8
    %v892 = vpop.permute.xlu0 %891
    %895 = vrot.lane.b32.xlu0 %v822, 16
    %v896 = vpop.permute.xlu0 %895
    %899 = vrot.lane.b32.xlu0 %v888, 24
    %v900 = vpop.permute.xlu0 %899
    %v902 = vsel %vm250, %v689, %v892
    %v903 = vsel %vm524, %v902, %v896
    %v904 = vsel %vm526, %v903, %v900
    %v906 = vsel %vm174, %v904, 0
    %908 = vmatpush.msra.mxu0 0.0
    %909 = vmatpush.msra.mxu0 0.0
    %910 = vmatpush.msra.mxu0 0.0
    %911 = vmatpush.msra.mxu0 0.0
    %912 = vmatpush.msra.mxu0 0.0
    %913 = vmatpush.msra.mxu0 0.0
    %914 = vmatpush.msra.mxu0 0.0
    %915 = vmatpush.msra.mxu0 0.0
    %916 = vmatpush.msra.mxu0 0.0
    %917 = vmatpush.msra.mxu0 0.0
    %918 = vmatpush.msra.mxu0 0.0
    %919 = vmatpush.msra.mxu0 0.0
    %920 = vmatpush.msra.mxu0 %v163
    %921 = vmatpush.msra.mxu0 %v162
    %922 = vmatpush.msra.mxu0 %v161
    %923 = vmatpush.msra.mxu0 %v160
    %924 = vmatmul.f32.gmra.mxu0 %v906
    %v925 = vpop.f32.mrf.mxu0
    %v926 = vadd.f32 %v529, %v925
    %927 = vdwg.mxu0
    %s928 = scalar_lea.vmem [#allocation14], 8
    %929 = vst.msk [vmem:[%s928] sm:$0xff] %vm174, %v926
    // Predicated region
    $region74: #{tpu_custom_call.1} parent=1 // pred_check
      _
    $region75: #{tpu_custom_call.1} parent=1 // pred_check_branch
      %931 = sbr.rel (0) target = $region77
    $region76: #{tpu_custom_call.1} parent=1 // pred_region
      %933 = vsyncadd [#allocation4], 0
      %s934 = sshll.u32 [#allocation14], 4
      %s935 = int_to_ptr.vmem [resolvable:$true] %s934
      %s936 = sshll.u32 %s11, 4
      %s937 = int_to_ptr.hbm [resolvable:$true] %s936
      %942 = dma.vmem_to_hbm [thread:$0]  %s935, 256, %s937, [#allocation4], 128, 128, 8
    $region77: #{tpu_custom_call.1} parent=1 // pred_fallthru
      _
    // Predicated region
    $region78: #{tpu_custom_call.1} parent=1 // pred_check
      _
    $region79: #{tpu_custom_call.1} parent=1 // pred_check_branch
      %944 = sbr.rel (0) target = $region81
    $region80: #{tpu_custom_call.1} parent=1 // pred_region
      %946 = dma.done [#allocation4], 256
    $region81: #{tpu_custom_call.1} parent=1 // pred_fallthru
      _
    %947 = vsyncpa [#allocation3], 1
    %948 = vsyncpa [#allocation6], 1
    %949 = vsyncpa [#allocation9], 1
    %950 = vsyncpa [#allocation12], 1
    %951 = vsyncpa [#allocation4], 1

</llo_original>
